<compile_context>
chip_gen: v7x
topology: tpu7x:2x2x1
jax: 0.10.0
libtpu: 0.0.40
codegen_flags: <defaults>
</compile_context>

<pallas_src>
import functools

import jax
import jax.numpy as jnp
from jax.experimental import pallas as pl
from jax.experimental.pallas import tpu as pltpu


LANE = 128          # lane width of the fused weight / output block
SEG_HIDDEN = 48     # segmentor hidden size (nn.Linear(768, 48))
SEG_OUT = 4         # segmentor tag count (nn.Linear(48, 4))
CRITERIA = 10       # criteria classes (nn.Linear(768, 10))
LN_EPS = 1e-5       # nn.LayerNorm default eps


def _round_up(n, m):
    return ((n + m - 1) // m) * m


# ----------------------------- kernel -------------------------------------- #

def cws_fused_kernel(x_ref, wcat_ref, p_ref, w2_ref, o_ref, *, d1, ncrit, d2):
    # x:    [rows, 768] bf16
    # wcat: [768, 128]  bf16; cols 0:d1 = w1, cols d1:d1+ncrit = w_c, rest zero
    # p:    [8, 128]    f32;  row0 = [b1 | b_c | 0], row1 = [gamma|0],
    #                         row2 = [beta|0], row3 = [b2|0]
    # w2:   [128, 128]  bf16; rows 0:d1, cols 0:d2 = w2, rest zero
    # o:    [rows, 128] f32;  cols 0:d2 = seg logits, cols d1:d1+ncrit = criteria
    x = x_ref[...]
    bias = p_ref[0:1, :]
    gamma = p_ref[1:2, :]
    beta = p_ref[2:3, :]
    b2 = p_ref[3:4, :]

    # Fused first projection: both heads in one lane-dense bf16 MXU pass,
    # f32 accumulation.
    h = jnp.dot(x, wcat_ref[...], preferred_element_type=jnp.float32) + bias

    col = jax.lax.broadcasted_iota(jnp.int32, h.shape, dimension=1)
    seg_mask = col < d1
    crit_mask = jnp.logical_and(col >= d1, col < d1 + ncrit)

    # LayerNorm over the d1 segmentor columns only (masked, f32 math).
    inv_d1 = 1.0 / float(d1)
    hm = jnp.where(seg_mask, h, 0.0)
    mean = jnp.sum(hm, axis=-1, keepdims=True) * inv_d1
    centered = jnp.where(seg_mask, h - mean, 0.0)
    var = jnp.sum(centered * centered, axis=-1, keepdims=True) * inv_d1
    ln = centered * jax.lax.rsqrt(var + LN_EPS) * gamma + beta
    # gamma/beta are zero outside cols 0:d1, so ln is exactly zero there.

    # Second projection, lane-padded to 128 output columns (cols 0:d2 live).
    seg = jnp.dot(ln.astype(w2_ref.dtype), w2_ref[...],
                  preferred_element_type=jnp.float32) + b2

    # Criteria logits pass through at cols d1:d1+ncrit (disjoint from 0:d2).
    o_ref[...] = seg + jnp.where(crit_mask, h, 0.0)


# ----------------------------- wrapper -------------------------------------- #

def cws_forward(last_hidden_state, params, *, row_block=2048):
    """Mirrors CWSmodel.forward on top of the BERT last_hidden_state."""
    B, S, H = last_hidden_state.shape
    d1 = params["w1"].shape[1]      # 48
    ncrit = params["w_c"].shape[1]  # 10
    d2 = params["w2"].shape[1]      # 4
    assert d1 + ncrit <= LANE and d2 <= LANE

    # No slice / cast / pad passes over the activation: contiguous reshape only.
    cdt = last_hidden_state.dtype   # keep the backbone's dtype (bf16 here)
    x2d = last_hidden_state.reshape(B * S, H)

    # Fused [768, 128] first-layer weight (bf16), zero outside live columns.
    wcat = jnp.zeros((H, LANE), cdt)
    wcat = wcat.at[:, :d1].set(params["w1"].astype(cdt))
    wcat = wcat.at[:, d1:d1 + ncrit].set(params["w_c"].astype(cdt))

    # Packed small parameters: one lane-dense (8, 128) f32 block (LN math f32).
    p = jnp.zeros((8, LANE), jnp.float32)
    p = p.at[0, :d1].set(params["b1"].astype(jnp.float32))
    p = p.at[0, d1:d1 + ncrit].set(params["b_c"].astype(jnp.float32))
    p = p.at[1, :d1].set(params["gamma"].astype(jnp.float32))
    p = p.at[2, :d1].set(params["beta"].astype(jnp.float32))
    p = p.at[3, :d2].set(params["b2"].astype(jnp.float32))

    # Lane-padded second projection (bf16), zero outside live rows/cols.
    w2p = jnp.zeros((LANE, LANE), cdt)
    w2p = w2p.at[:d1, :d2].set(params["w2"].astype(cdt))

    # Row tiling: sublane-aligned; keep >= 2 grid steps so v7x's two TCs both
    # get work, and cap at row_block (2048 rows bf16 = 3 MiB/tile) so
    # double-buffered tiles stay far under every generation's scoped VMEM.
    N = B * S
    half = max(8, _round_up(_round_up(N, 8) // 2, 8))
    block_rows = max(8, min(_round_up(row_block, 8), half))
    grid = pl.cdiv(N, block_rows)

    kernel = functools.partial(cws_fused_kernel, d1=d1, ncrit=ncrit, d2=d2)

    out = pl.pallas_call(
        kernel,
        out_shape=jax.ShapeDtypeStruct((N, LANE), jnp.float32),
        grid_spec=pltpu.PrefetchScalarGridSpec(
            num_scalar_prefetch=0,
            grid=(grid,),
            in_specs=[
                pl.BlockSpec((block_rows, H), lambda i: (i, 0)),
                pl.BlockSpec((H, LANE), lambda i: (0, 0)),
                pl.BlockSpec((8, LANE), lambda i: (0, 0)),
                pl.BlockSpec((LANE, LANE), lambda i: (0, 0)),
            ],
            out_specs=pl.BlockSpec((block_rows, LANE), lambda i: (i, 0)),
        ),
        compiler_params=pltpu.CompilerParams(
            dimension_semantics=("parallel",)),
    )(x2d, wcat, p, w2p)

    # Layout plumbing on the tiny [B, S, 128] output (free vs. the activation).
    out = out.reshape(B, S, LANE)
    criteria = out[:, 1, d1:d1 + ncrit]   # [B, 10]   (token index 1)
    seg = out[:, 1:, :d2]                 # [B, S-1, 4]
    return criteria, seg


# ----------------------------- reference ------------------------------------ #

def cws_forward_ref(last_hidden_state, params):
    x = last_hidden_state.astype(jnp.float32)
    x_c = x[:, 1, :]
    criteria = x_c @ params["w_c"] + params["b_c"]

    xs = x[:, 1:, :]
    h = xs @ params["w1"] + params["b1"]
    mean = jnp.mean(h, axis=-1, keepdims=True)
    var = jnp.mean((h - mean) ** 2, axis=-1, keepdims=True)
    h = (h - mean) / jnp.sqrt(var + LN_EPS) * params["gamma"] + params["beta"]
    seg = h @ params["w2"] + params["b2"]
    return criteria, seg


# ------------------------------- main ---------------------------------------- #

if __name__ == "__main__":
    B, S, H = 2, 8, 768          # batch, seq, BERT hidden size (fixed by module)
    CRIT, D1, D2 = CRITERIA, SEG_HIDDEN, SEG_OUT

    key = jax.random.PRNGKey(0)
    keys = jax.random.split(key, 8)

    # Synthetic BERT last_hidden_state, already bf16 (as a real backbone would
    # emit) -- no wrapper-side dtype cast pass.
    x = jax.random.normal(keys[0], (B, S, H), dtype=jnp.float32).astype(jnp.bfloat16)

    # Deterministic parameter init (PyTorch stores Linear weights as [out,in];
    # we generate [in,out] directly for the kernel's x @ W convention).
    scale = 0.02
    params = {
        "w_c": scale * jax.random.normal(keys[1], (H, CRIT), jnp.float32),
        "b_c": scale * jax.random.normal(keys[2], (CRIT,), jnp.float32),
        "w1": scale * jax.random.normal(keys[3], (H, D1), jnp.float32),
        "b1": scale * jax.random.normal(keys[4], (D1,), jnp.float32),
        "gamma": jnp.ones((D1,), jnp.float32),   # nn.LayerNorm default init
        "beta": jnp.zeros((D1,), jnp.float32),
        "w2": scale * jax.random.normal(keys[5], (D1, D2), jnp.float32),
        "b2": scale * jax.random.normal(keys[6], (D2,), jnp.float32),
    }

    criteria, seg = jax.block_until_ready(cws_forward(x, params))
    criteria_ref, seg_ref = cws_forward_ref(x, params)

    assert criteria.shape == (B, CRIT)
    assert seg.shape == (B, S - 1, D2)
    # bf16 weights/activations on the MXU path -> loosened tolerances.
    assert jnp.allclose(criteria, criteria_ref, atol=3e-2, rtol=3e-2)
    assert jnp.allclose(seg, seg_ref, atol=3e-2, rtol=3e-2)

    print("KERNEL_OK")
</pallas_src>

<mosaic_0001>
module attributes {stable_mosaic.version = 11 : i64} {
  func.func @cws_fused_kernel(%arg0: i32, %arg1: memref<8x768xbf16, #tpu.memory_space<vmem>>, %arg2: memref<768x128xbf16, #tpu.memory_space<vmem>>, %arg3: memref<8x128xf32, #tpu.memory_space<vmem>>, %arg4: memref<128x128xbf16, #tpu.memory_space<vmem>>, %arg5: memref<8x128xf32, #tpu.memory_space<vmem>>) attributes {dimension_semantics = [#tpu.dimension_semantics<parallel>], iteration_bounds = array<i64: 2>, scalar_prefetch = 0 : i64, scratch_operands = 0 : i64, tpu.core_type = #tpu.core_type<tc>, window_params = [{transform_indices = @transform_0, window_bounds = array<i64: 8, 768>}, {pipeline_mode = #tpu.pipeline_mode<synchronous>, transform_indices = @transform_1, window_bounds = array<i64: 768, 128>}, {pipeline_mode = #tpu.pipeline_mode<synchronous>, transform_indices = @transform_2, window_bounds = array<i64: 8, 128>}, {pipeline_mode = #tpu.pipeline_mode<synchronous>, transform_indices = @transform_3, window_bounds = array<i64: 128, 128>}, {transform_indices = @transform_4, window_bounds = array<i64: 8, 128>}]} {
    %c0 = arith.constant 0 : index
    %c0_0 = arith.constant 0 : index
    %0 = vector.load %arg1[%c0, %c0_0] : memref<8x768xbf16, #tpu.memory_space<vmem>>, vector<8x768xbf16>
    %c0_1 = arith.constant 0 : index
    %c0_2 = arith.constant 0 : index
    %1 = vector.load %arg3[%c0_1, %c0_2] : memref<8x128xf32, #tpu.memory_space<vmem>>, vector<1x128xf32>
    %c1 = arith.constant 1 : index
    %c0_3 = arith.constant 0 : index
    %2 = vector.load %arg3[%c1, %c0_3] : memref<8x128xf32, #tpu.memory_space<vmem>>, vector<1x128xf32>
    %c2 = arith.constant 2 : index
    %c0_4 = arith.constant 0 : index
    %3 = vector.load %arg3[%c2, %c0_4] : memref<8x128xf32, #tpu.memory_space<vmem>>, vector<1x128xf32>
    %c3 = arith.constant 3 : index
    %c0_5 = arith.constant 0 : index
    %4 = vector.load %arg3[%c3, %c0_5] : memref<8x128xf32, #tpu.memory_space<vmem>>, vector<1x128xf32>
    %c0_6 = arith.constant 0 : index
    %c0_7 = arith.constant 0 : index
    %5 = vector.load %arg2[%c0_6, %c0_7] : memref<768x128xbf16, #tpu.memory_space<vmem>>, vector<768x128xbf16>
    %cst = arith.constant dense<0.000000e+00> : vector<8x128xf32>
    %6 = tpu.matmul %0, %5, %cst {dimension_numbers = #tpu.dot_dimension_numbers<[1], [0], [0], [1], [0, 0, 1, 1], [], []>} : vector<8x768xbf16>, vector<768x128xbf16>, vector<8x128xf32> -> vector<8x128xf32>
    %7 = vector.broadcast %1 : vector<1x128xf32> to vector<8x128xf32>
    %8 = arith.addf %6, %7 : vector<8x128xf32>
    %9 = tpu.iota {dimensions = array<i32: 1>} : vector<8x128xi32>
    %c48_i32 = arith.constant 48 : i32
    %10 = vector.broadcast %c48_i32 : i32 to vector<8x128xi32>
    %11 = arith.cmpi slt, %9, %10 : vector<8x128xi32>
    %c48_i32_8 = arith.constant 48 : i32
    %12 = vector.broadcast %c48_i32_8 : i32 to vector<8x128xi32>
    %13 = arith.cmpi sge, %9, %12 : vector<8x128xi32>
    %c58_i32 = arith.constant 58 : i32
    %14 = vector.broadcast %c58_i32 : i32 to vector<8x128xi32>
    %15 = arith.cmpi slt, %9, %14 : vector<8x128xi32>
    %16 = arith.andi %13, %15 : vector<8x128xi1>
    %cst_9 = arith.constant 0.000000e+00 : f32
    %17 = vector.broadcast %cst_9 : f32 to vector<8x128xf32>
    %18 = arith.select %11, %8, %17 : vector<8x128xi1>, vector<8x128xf32>
    %cst_10 = arith.constant dense<0.000000e+00> : vector<8xf32>
    %19 = vector.multi_reduction <add>, %18, %cst_10 [1] : vector<8x128xf32> to vector<8xf32>
    %20 = vector.shape_cast %19 : vector<8xf32> to vector<8x1xf32>
    %cst_11 = arith.constant 0.020833334 : f32
    %21 = vector.broadcast %cst_11 : f32 to vector<8x1xf32>
    %22 = arith.mulf %20, %21 : vector<8x1xf32>
    %23 = vector.broadcast %22 : vector<8x1xf32> to vector<8x128xf32>
    %24 = arith.subf %8, %23 : vector<8x128xf32>
    %cst_12 = arith.constant 0.000000e+00 : f32
    %25 = vector.broadcast %cst_12 : f32 to vector<8x128xf32>
    %26 = arith.select %11, %24, %25 : vector<8x128xi1>, vector<8x128xf32>
    %27 = arith.mulf %26, %26 : vector<8x128xf32>
    %cst_13 = arith.constant dense<0.000000e+00> : vector<8xf32>
    %28 = vector.multi_reduction <add>, %27, %cst_13 [1] : vector<8x128xf32> to vector<8xf32>
    %29 = vector.shape_cast %28 : vector<8xf32> to vector<8x1xf32>
    %cst_14 = arith.constant 0.020833334 : f32
    %30 = vector.broadcast %cst_14 : f32 to vector<8x1xf32>
    %31 = arith.mulf %29, %30 : vector<8x1xf32>
    %cst_15 = arith.constant 9.99999974E-6 : f32
    %32 = vector.broadcast %cst_15 : f32 to vector<8x1xf32>
    %33 = arith.addf %31, %32 : vector<8x1xf32>
    %34 = math.rsqrt %33 : vector<8x1xf32>
    %35 = vector.broadcast %34 : vector<8x1xf32> to vector<8x128xf32>
    %36 = arith.mulf %26, %35 : vector<8x128xf32>
    %37 = vector.broadcast %2 : vector<1x128xf32> to vector<8x128xf32>
    %38 = arith.mulf %36, %37 : vector<8x128xf32>
    %39 = vector.broadcast %3 : vector<1x128xf32> to vector<8x128xf32>
    %40 = arith.addf %38, %39 : vector<8x128xf32>
    %41 = arith.truncf %40 : vector<8x128xf32> to vector<8x128xbf16>
    %c0_16 = arith.constant 0 : index
    %c0_17 = arith.constant 0 : index
    %42 = vector.load %arg4[%c0_16, %c0_17] : memref<128x128xbf16, #tpu.memory_space<vmem>>, vector<128x128xbf16>
    %cst_18 = arith.constant dense<0.000000e+00> : vector<8x128xf32>
    %43 = tpu.matmul %41, %42, %cst_18 {dimension_numbers = #tpu.dot_dimension_numbers<[1], [0], [0], [1], [0, 0, 1, 1], [], []>} : vector<8x128xbf16>, vector<128x128xbf16>, vector<8x128xf32> -> vector<8x128xf32>
    %44 = vector.broadcast %4 : vector<1x128xf32> to vector<8x128xf32>
    %45 = arith.addf %43, %44 : vector<8x128xf32>
    %cst_19 = arith.constant 0.000000e+00 : f32
    %46 = vector.broadcast %cst_19 : f32 to vector<8x128xf32>
    %47 = arith.select %16, %8, %46 : vector<8x128xi1>, vector<8x128xf32>
    %48 = arith.addf %45, %47 : vector<8x128xf32>
    %c0_20 = arith.constant 0 : index
    %c0_21 = arith.constant 0 : index
    %49 = vector.load %arg5[%c0_20, %c0_21] : memref<8x128xf32, #tpu.memory_space<vmem>>, vector<8x128xf32>
    tpu.vector_store %arg5[%c0_20, %c0_21], %48 {strides = array<i32>} : memref<8x128xf32, #tpu.memory_space<vmem>>, vector<8x128xf32>,
    return
  }
  func.func @transform_0(%arg0: i32) -> (i32, i32) {
    %c0_i32 = arith.constant 0 : i32
    %c0_i32_0 = arith.constant 0 : i32
    return %arg0, %c0_i32 : i32, i32
  }
  func.func @transform_1(%arg0: i32) -> (i32, i32) {
    %c0_i32 = arith.constant 0 : i32
    %c0_i32_0 = arith.constant 0 : i32
    %c0_i32_1 = arith.constant 0 : i32
    return %c0_i32, %c0_i32_0 : i32, i32
  }
  func.func @transform_2(%arg0: i32) -> (i32, i32) {
    %c0_i32 = arith.constant 0 : i32
    %c0_i32_0 = arith.constant 0 : i32
    %c0_i32_1 = arith.constant 0 : i32
    return %c0_i32, %c0_i32_0 : i32, i32
  }
  func.func @transform_3(%arg0: i32) -> (i32, i32) {
    %c0_i32 = arith.constant 0 : i32
    %c0_i32_0 = arith.constant 0 : i32
    %c0_i32_1 = arith.constant 0 : i32
    return %c0_i32, %c0_i32_0 : i32, i32
  }
  func.func @transform_4(%arg0: i32) -> (i32, i32) {
    %c0_i32 = arith.constant 0 : i32
    %c0_i32_0 = arith.constant 0 : i32
    return %arg0, %c0_i32 : i32, i32
  }
}

</mosaic_0001>

<llo_original>
// kernel: tpu_custom_call.1
$region0: #{tpu_custom_call.1}
  #allocation0 [shape = 'u32[]', space=smem, size = 0x4, offset = 0x4, fixed_abs, tag = 'smem constant byte address 0x4 - core index']
  #allocation1 [shape = 'u32[144,128]{1,0:T(1,128)}', space=vmem, size = 0x12000, scoped, tag = 'internal scratch']
  %s0 = inlined_call_operand.hbm [shape: bf16[16,768], index: 0, kind: input, shape index: {}]
  %s1 = inlined_call_operand.hbm [shape: bf16[768,128], index: 1, kind: input, shape index: {}]
  %s2 = inlined_call_operand.hbm [shape: f32[8,128], index: 2, kind: input, shape index: {}]
  %s3 = inlined_call_operand.hbm [shape: bf16[128,128], index: 3, kind: input, shape index: {}]
  %s4 = inlined_call_operand.hbm [shape: f32[16,128], index: 4, kind: output, shape index: {}]
  %s5 = sld [smem:[#allocation0]]
  $region65: #{tpu_custom_call.1} parent=0
    _
  %s7 = ssub.s32 1, %s5
  %s8 = scalar_select 0, %s7, %s5
  $region1: #{tpu_custom_call.1} parent=0
    #allocation2 [shape = 'u8[24576]{0}', space=vmem, size = 0x6000, scoped, tag = 'input window, operand 0']
    #allocation3 [shape = 's32[2]{0}', space=sflag, size = 0x8, scoped, tag = 'scoped memory for tpu_custom_call.1']
    #allocation4 [shape = 's32[2]{0}', space=sflag, size = 0x8, scoped, tag = 'scoped memory for tpu_custom_call.1']
    #allocation5 [shape = 'u8[196608]{0}', space=vmem, size = 0x30000, scoped, tag = 'input window, operand 1, single buffered']
    #allocation6 [shape = 's32[1]{0}', space=sflag, size = 0x4, scoped, tag = 'scoped memory for tpu_custom_call.1']
    #allocation7 [shape = 'u8[4096]{0}', space=vmem, size = 0x1000, scoped, tag = 'input window, operand 2, single buffered']
    #allocation8 [shape = 'u8[32768]{0}', space=vmem, size = 0x8000, scoped, tag = 'input window, operand 3, single buffered']
    #allocation9 [shape = 's32[1]{0}', space=sflag, size = 0x4, scoped, tag = 'scoped memory for tpu_custom_call.1']
    #allocation10 [shape = 'u8[8192]{0}', space=vmem, size = 0x2000, scoped, tag = 'output window, operand 0']
    %9 = vsyncpa [#allocation3], 0
    %s10 = scalar_lea.sflag [#allocation3], 1
    %11 = vsyncpa %s10, 0
    %12 = vsyncpa [#allocation6], 0
    %13 = vsyncpa [#allocation9], 0
    %14 = vsyncpa [#allocation4], 0
    %s15 = scalar_lea.sflag [#allocation4], 1
    %16 = vsyncpa %s15, 0
    loop: start=0, step=1, limit=4
    $region2: #{tpu_custom_call.1} parent=1 // loop_pre_header
      _
    $region3: #{tpu_custom_call.1} parent=1 // loop_header
      %s18 = sphi 0, %s22
      %p19 = scmp.ge.s32.totalorder %s18, 4
      %s28 = sphi 0, %s30
      %s31 = sphi 0, %s28
      %s32 = sphi 0, %s31
      %s48 = sphi 0, %s32
      %s52 = sphi 0, %s52
      %s54 = sphi 0, %s52
      %s55 = sphi 0, %s54
      %s69 = sphi 0, %s55
      %s73 = sphi 0, %s73
      %s75 = sphi 0, %s73
      %s76 = sphi 0, %s75
      %s90 = sphi 0, %s76
      %s94 = sphi 0, %s94
      %s96 = sphi 0, %s94
      %s97 = sphi 0, %s96
      %s111 = sphi 0, %s97
      %s117 = sphi 0, %s119
      %s120 = sphi 0, %s117
      %s121 = sphi 0, %s120
      %s137 = sphi 0, %s121
    $region4: #{tpu_custom_call.1} parent=1 // loop_header_branch
      %21 = sbr.rel (%p19) target = $region8
    $region5: #{tpu_custom_call.1} parent=1 // loop_body
      %s23 = ssub.s32 %s18, 1
      %s24 = ssub.s32 %s18, 2
      %s25 = sadd.s32 %s18, 1
      %s26 = ssub.s32 %s18, %s25
      %p27 = scmp.eq.s32.totalorder %s26, 0
      %s29 = sadd.s32 %s28, 1
      %s30 = scalar_select %p27, %s28, %s29
      %p33 = pneg %p27
      %p34 = scmp.eq.s32.totalorder %s18, 1
      %p35 = por %p33, %p34
      %p36 = scmp.ne.s32.totalorder %s28, %s31
      %p37 = scmp.eq.s32.totalorder %s18, 0
      %p38 = por %p36, %p37
      %p39 = scmp.ne.s32.totalorder %s28, %s31
      %p40 = scmp.eq.s32.totalorder %s23, 1
      %p41 = por %p39, %p40
      %p42 = scmp.ne.s32.totalorder %s31, %s32
      %p43 = scmp.eq.s32.totalorder %s23, 0
      %p44 = por %p42, %p43
      %p45 = scmp.ne.s32.totalorder %s31, %s32
      %p46 = scmp.eq.s32.totalorder %s24, 1
      %p47 = por %p45, %p46
      %p49 = scmp.ne.s32.totalorder %s32, %s48
      %p50 = scmp.eq.s32.totalorder %s24, 0
      %p51 = por %p49, %p50
      %s53 = sadd.s32 %s52, 1
      %p56 = scmp.eq.s32.totalorder %s18, 1
      %p57 = scmp.ne.s32.totalorder %s52, %s54
      %p58 = scmp.eq.s32.totalorder %s18, 0
      %p59 = por %p57, %p58
      %p60 = scmp.ne.s32.totalorder %s52, %s54
      %p61 = scmp.eq.s32.totalorder %s23, 1
      %p62 = por %p60, %p61
      %p63 = scmp.ne.s32.totalorder %s54, %s55
      %p64 = scmp.eq.s32.totalorder %s23, 0
      %p65 = por %p63, %p64
      %p66 = scmp.ne.s32.totalorder %s54, %s55
      %p67 = scmp.eq.s32.totalorder %s24, 1
      %p68 = por %p66, %p67
      %p70 = scmp.ne.s32.totalorder %s55, %s69
      %p71 = scmp.eq.s32.totalorder %s24, 0
      %p72 = por %p70, %p71
      %s74 = sadd.s32 %s73, 1
      %p77 = scmp.eq.s32.totalorder %s18, 1
      %p78 = scmp.ne.s32.totalorder %s73, %s75
      %p79 = scmp.eq.s32.totalorder %s18, 0
      %p80 = por %p78, %p79
      %p81 = scmp.ne.s32.totalorder %s73, %s75
      %p82 = scmp.eq.s32.totalorder %s23, 1
      %p83 = por %p81, %p82
      %p84 = scmp.ne.s32.totalorder %s75, %s76
      %p85 = scmp.eq.s32.totalorder %s23, 0
      %p86 = por %p84, %p85
      %p87 = scmp.ne.s32.totalorder %s75, %s76
      %p88 = scmp.eq.s32.totalorder %s24, 1
      %p89 = por %p87, %p88
      %p91 = scmp.ne.s32.totalorder %s76, %s90
      %p92 = scmp.eq.s32.totalorder %s24, 0
      %p93 = por %p91, %p92
      %s95 = sadd.s32 %s94, 1
      %p98 = scmp.eq.s32.totalorder %s18, 1
      %p99 = scmp.ne.s32.totalorder %s94, %s96
      %p100 = scmp.eq.s32.totalorder %s18, 0
      %p101 = por %p99, %p100
      %p102 = scmp.ne.s32.totalorder %s94, %s96
      %p103 = scmp.eq.s32.totalorder %s23, 1
      %p104 = por %p102, %p103
      %p105 = scmp.ne.s32.totalorder %s96, %s97
      %p106 = scmp.eq.s32.totalorder %s23, 0
      %p107 = por %p105, %p106
      %p108 = scmp.ne.s32.totalorder %s96, %s97
      %p109 = scmp.eq.s32.totalorder %s24, 1
      %p110 = por %p108, %p109
      %p112 = scmp.ne.s32.totalorder %s97, %s111
      %p113 = scmp.eq.s32.totalorder %s24, 0
      %p114 = por %p112, %p113
      %s115 = ssub.s32 %s18, %s25
      %p116 = scmp.eq.s32.totalorder %s115, 0
      %s118 = sadd.s32 %s117, 1
      %s119 = scalar_select %p116, %s117, %s118
      %p122 = pneg %p116
      %p123 = scmp.eq.s32.totalorder %s18, 1
      %p124 = por %p122, %p123
      %p125 = scmp.ne.s32.totalorder %s117, %s120
      %p126 = scmp.eq.s32.totalorder %s18, 0
      %p127 = por %p125, %p126
      %p128 = scmp.ne.s32.totalorder %s117, %s120
      %p129 = scmp.eq.s32.totalorder %s23, 1
      %p130 = por %p128, %p129
      %p131 = scmp.ne.s32.totalorder %s120, %s121
      %p132 = scmp.eq.s32.totalorder %s23, 0
      %p133 = por %p131, %p132
      %p134 = scmp.ne.s32.totalorder %s120, %s121
      %p135 = scmp.eq.s32.totalorder %s24, 1
      %p136 = por %p134, %p135
      %p138 = scmp.ne.s32.totalorder %s121, %s137
      %p139 = scmp.eq.s32.totalorder %s24, 0
      %p140 = por %p138, %p139
      %p141 = scmp.le.s32.totalorder 1, %s18
      %p142 = scmp.lt.s32.totalorder %s18, 3
      %p143 = pnand %p141, %p142
      %p144 = pneg %p143
      // Predicated region
      $region9: #{tpu_custom_call.1} parent=5 // pred_check
        _
      $region10: #{tpu_custom_call.1} parent=5 // pred_check_branch
        %146 = sbr.rel (%p143) target = $region12
      $region11: #{tpu_custom_call.1} parent=5 // pred_region
        %s147 = ssub.s32 %s18, 1
        // Predicated region
        $region13: #{tpu_custom_call.1} parent=11 // pred_check
          %p148 = pneg %p65
        $region14: #{tpu_custom_call.1} parent=11 // pred_check_branch
          %150 = sbr.rel (%p148) target = $region16
        $region15: #{tpu_custom_call.1} parent=11 // pred_region
          %s152 = ssub.s32 6144, 6144
          %153 = vsyncadd [#allocation6], %s152
          %s154 = sshll.u32 [#allocation5], 4
          %s155 = int_to_ptr.vmem [resolvable:$true] %s154
          %160 = dma.hbm_to_vmem [thread:$0]  %s1, 6144, %s155, [#allocation6], 64, 64, 4
        $region16: #{tpu_custom_call.1} parent=11 // pred_fallthru
          _
        // Predicated region
        $region17: #{tpu_custom_call.1} parent=11 // pred_check
          %p161 = pneg %p86
        $region18: #{tpu_custom_call.1} parent=11 // pred_check_branch
          %163 = sbr.rel (%p161) target = $region20
        $region19: #{tpu_custom_call.1} parent=11 // pred_region
          %s165 = ssub.s32 128, 128
          %166 = vsyncadd [#allocation6], %s165
          %s168 = sshll.u32 [#allocation7], 4
          %s169 = int_to_ptr.vmem [resolvable:$true] %s168
          %171 = dma.hbm_to_vmem [thread:$0]  %s2, 128, %s169, [#allocation6]
        $region20: #{tpu_custom_call.1} parent=11 // pred_fallthru
          _
        // Predicated region
        $region21: #{tpu_custom_call.1} parent=11 // pred_check
          %p172 = pneg %p107
        $region22: #{tpu_custom_call.1} parent=11 // pred_check_branch
          %174 = sbr.rel (%p172) target = $region24
        $region23: #{tpu_custom_call.1} parent=11 // pred_region
          %s176 = ssub.s32 1024, 1024
          %177 = vsyncadd [#allocation9], %s176
          %s178 = sshll.u32 [#allocation8], 4
          %s179 = int_to_ptr.vmem [resolvable:$true] %s178
          %184 = dma.hbm_to_vmem [thread:$0]  %s3, 1024, %s179, [#allocation9], 64, 64, 4
        $region24: #{tpu_custom_call.1} parent=11 // pred_fallthru
          _
      $region12: #{tpu_custom_call.1} parent=5 // pred_fallthru
        _
      %p185 = scmp.lt.s32.totalorder %s18, 2
      // Predicated region
      $region25: #{tpu_custom_call.1} parent=5 // pred_check
        %p186 = pneg %p185
      $region26: #{tpu_custom_call.1} parent=5 // pred_check_branch
        %188 = sbr.rel (%p186) target = $region28
      $region27: #{tpu_custom_call.1} parent=5 // pred_region
        // Predicated region
        $region29: #{tpu_custom_call.1} parent=27 // pred_check
          %p189 = pneg %p38
        $region30: #{tpu_custom_call.1} parent=27 // pred_check_branch
          %191 = sbr.rel (%p189) target = $region32
        $region31: #{tpu_custom_call.1} parent=27 // pred_region
          %s192 = sand.u32 %s28, 1
          %s193 = scalar_lea.sflag [#allocation3], %s192
          %s194 = sand.u32 %s28, 1
          %s195 = smul.addr %s194, 24
          %s196 = scalar_lea.vmem [#allocation2], %s195
          %s198 = ssub.s32 384, 384
          %199 = vsyncadd %s193, %s198
          %s200 = smul.addr %s18, 6
          %s201 = smul.addr %s200, 64
          %s202 = scalar_lea.hbm %s0, %s201
          %s204 = sshll.u32 %s196, 4
          %s205 = int_to_ptr.vmem [resolvable:$true] %s204
          %207 = dma.hbm_to_vmem [thread:$0]  %s202, 384, %s205, %s193
        $region32: #{tpu_custom_call.1} parent=27 // pred_fallthru
          _
      $region28: #{tpu_custom_call.1} parent=5 // pred_fallthru
        _
      %p208 = scmp.le.s32.totalorder 1, %s18
      %p209 = scmp.lt.s32.totalorder %s18, 3
      %p210 = pnand %p208, %p209
      %p211 = pneg %p210
      // Predicated region
      $region33: #{tpu_custom_call.1} parent=5 // pred_check
        _
      $region34: #{tpu_custom_call.1} parent=5 // pred_check_branch
        %213 = sbr.rel (%p210) target = $region36
      $region35: #{tpu_custom_call.1} parent=5 // pred_region
        %s214 = ssub.s32 %s18, 1
        %s215 = sand.u32 %s31, 1
        %s216 = scalar_lea.sflag [#allocation3], %s215
        %s217 = sand.u32 %s31, 1
        %s218 = smul.addr %s217, 24
        %s219 = scalar_lea.vmem [#allocation2], %s218
        // Predicated region
        $region37: #{tpu_custom_call.1} parent=35 // pred_check
          %p220 = pneg %p44
        $region38: #{tpu_custom_call.1} parent=35 // pred_check_branch
          %222 = sbr.rel (%p220) target = $region40
        $region39: #{tpu_custom_call.1} parent=35 // pred_region
          %223 = dma.done %s216, 384
        $region40: #{tpu_custom_call.1} parent=35 // pred_fallthru
          _
        // Predicated region
        $region41: #{tpu_custom_call.1} parent=35 // pred_check
          %p224 = pneg %p65
        $region42: #{tpu_custom_call.1} parent=35 // pred_check_branch
          %226 = sbr.rel (%p224) target = $region44
        $region43: #{tpu_custom_call.1} parent=35 // pred_region
          %227 = dma.done [#allocation6], 6144
        $region44: #{tpu_custom_call.1} parent=35 // pred_fallthru
          _
        // Predicated region
        $region45: #{tpu_custom_call.1} parent=35 // pred_check
          %p228 = pneg %p86
        $region46: #{tpu_custom_call.1} parent=35 // pred_check_branch
          %230 = sbr.rel (%p228) target = $region48
        $region47: #{tpu_custom_call.1} parent=35 // pred_region
          %231 = dma.done [#allocation6], 128
        $region48: #{tpu_custom_call.1} parent=35 // pred_fallthru
          _
        // Predicated region
        $region49: #{tpu_custom_call.1} parent=35 // pred_check
          %p232 = pneg %p107
        $region50: #{tpu_custom_call.1} parent=35 // pred_check_branch
          %234 = sbr.rel (%p232) target = $region52
        $region51: #{tpu_custom_call.1} parent=35 // pred_region
          %235 = dma.done [#allocation9], 1024
        $region52: #{tpu_custom_call.1} parent=35 // pred_fallthru
          _
        %s236 = sand.u32 %s31, 1
        %s237 = scalar_lea.sflag [#allocation3], %s236
        %s238 = sand.u32 %s31, 1
        %s239 = smul.addr %s238, 24
        %s240 = scalar_lea.vmem [#allocation2], %s239
        %p241 = pneg %p44
        %p242 = pneg %p41
        %p243 = pneg %p65
        %p244 = pneg %p62
        %p245 = pneg %p86
        %p246 = pneg %p83
        %p247 = pneg %p107
        %p248 = pneg %p104
        %p249 = pneg %p133
        %p250 = pneg %p130
        %s251 = sand.u32 %s120, 1
        %s252 = scalar_lea.sflag [#allocation4], %s251
        %s253 = sand.u32 %s120, 1
        %s254 = smul.addr %s253, 8
        %s255 = scalar_lea.vmem [#allocation10], %s254
        %v257 = vld [vmem:[%s219] sm:$0xff]
        %v258 = vld [vmem:[%s219 + $0x8] sm:$0xff]
        %v259 = vld [vmem:[%s219 + $0x10] sm:$0xff]
        %v260 = vld [vmem:[#allocation7] sm:$0x1]
        %v261 = vld [vmem:[#allocation7 + $0x1] sm:$0x1]
        %v262 = vld [vmem:[#allocation7 + $0x2] sm:$0x1]
        %v263 = vld [vmem:[#allocation7 + $0x3] sm:$0x1]
        %v264 = vld [vmem:[#allocation5] sm:$0xf]
        %v265 = vld [vmem:[#allocation5 + $0x4] sm:$0xf]
        %v266 = vld [vmem:[#allocation5 + $0x8] sm:$0xf]
        %v267 = vld [vmem:[#allocation5 + $0xc] sm:$0xf]
        %v268 = vld [vmem:[#allocation5 + $0x10] sm:$0xf]
        %v269 = vld [vmem:[#allocation5 + $0x14] sm:$0xf]
        %v270 = vld [vmem:[#allocation5 + $0x18] sm:$0xf]
        %v271 = vld [vmem:[#allocation5 + $0x1c] sm:$0xf]
        %v272 = vld [vmem:[#allocation5 + $0x20] sm:$0xf]
        %v273 = vld [vmem:[#allocation5 + $0x24] sm:$0xf]
        %v274 = vld [vmem:[#allocation5 + $0x28] sm:$0xf]
        %v275 = vld [vmem:[#allocation5 + $0x2c] sm:$0xf]
        %v276 = vld [vmem:[#allocation5 + $0x30] sm:$0xf]
        %v277 = vld [vmem:[#allocation5 + $0x34] sm:$0xf]
        %v278 = vld [vmem:[#allocation5 + $0x38] sm:$0xf]
        %v279 = vld [vmem:[#allocation5 + $0x3c] sm:$0xf]
        %v280 = vld [vmem:[#allocation5 + $0x40] sm:$0xf]
        %v281 = vld [vmem:[#allocation5 + $0x44] sm:$0xf]
        %v282 = vld [vmem:[#allocation5 + $0x48] sm:$0xf]
        %v283 = vld [vmem:[#allocation5 + $0x4c] sm:$0xf]
        %v284 = vld [vmem:[#allocation5 + $0x50] sm:$0xf]
        %v285 = vld [vmem:[#allocation5 + $0x54] sm:$0xf]
        %v286 = vld [vmem:[#allocation5 + $0x58] sm:$0xf]
        %v287 = vld [vmem:[#allocation5 + $0x5c] sm:$0xf]
        %v288 = vld [vmem:[#allocation5 + $0x60] sm:$0xf]
        %v289 = vld [vmem:[#allocation5 + $0x64] sm:$0xf]
        %v290 = vld [vmem:[#allocation5 + $0x68] sm:$0xf]
        %v291 = vld [vmem:[#allocation5 + $0x6c] sm:$0xf]
        %v292 = vld [vmem:[#allocation5 + $0x70] sm:$0xf]
        %v293 = vld [vmem:[#allocation5 + $0x74] sm:$0xf]
        %v294 = vld [vmem:[#allocation5 + $0x78] sm:$0xf]
        %v295 = vld [vmem:[#allocation5 + $0x7c] sm:$0xf]
        %v296 = vld [vmem:[#allocation5 + $0x80] sm:$0xf]
        %v297 = vld [vmem:[#allocation5 + $0x84] sm:$0xf]
        %v298 = vld [vmem:[#allocation5 + $0x88] sm:$0xf]
        %v299 = vld [vmem:[#allocation5 + $0x8c] sm:$0xf]
        %v300 = vld [vmem:[#allocation5 + $0x90] sm:$0xf]
        %v301 = vld [vmem:[#allocation5 + $0x94] sm:$0xf]
        %v302 = vld [vmem:[#allocation5 + $0x98] sm:$0xf]
        %v303 = vld [vmem:[#allocation5 + $0x9c] sm:$0xf]
        %v304 = vld [vmem:[#allocation5 + $0xa0] sm:$0xf]
        %v305 = vld [vmem:[#allocation5 + $0xa4] sm:$0xf]
        %v306 = vld [vmem:[#allocation5 + $0xa8] sm:$0xf]
        %v307 = vld [vmem:[#allocation5 + $0xac] sm:$0xf]
        %v308 = vld [vmem:[#allocation5 + $0xb0] sm:$0xf]
        %v309 = vld [vmem:[#allocation5 + $0xb4] sm:$0xf]
        %v310 = vld [vmem:[#allocation5 + $0xb8] sm:$0xf]
        %v311 = vld [vmem:[#allocation5 + $0xbc] sm:$0xf]
        %v312 = vld [vmem:[#allocation5 + $0xc0] sm:$0xf]
        %v313 = vld [vmem:[#allocation5 + $0xc4] sm:$0xf]
        %v314 = vld [vmem:[#allocation5 + $0xc8] sm:$0xf]
        %v315 = vld [vmem:[#allocation5 + $0xcc] sm:$0xf]
        %v316 = vld [vmem:[#allocation5 + $0xd0] sm:$0xf]
        %v317 = vld [vmem:[#allocation5 + $0xd4] sm:$0xf]
        %v318 = vld [vmem:[#allocation5 + $0xd8] sm:$0xf]
        %v319 = vld [vmem:[#allocation5 + $0xdc] sm:$0xf]
        %v320 = vld [vmem:[#allocation5 + $0xe0] sm:$0xf]
        %v321 = vld [vmem:[#allocation5 + $0xe4] sm:$0xf]
        %v322 = vld [vmem:[#allocation5 + $0xe8] sm:$0xf]
        %v323 = vld [vmem:[#allocation5 + $0xec] sm:$0xf]
        %v324 = vld [vmem:[#allocation5 + $0xf0] sm:$0xf]
        %v325 = vld [vmem:[#allocation5 + $0xf4] sm:$0xf]
        %v326 = vld [vmem:[#allocation5 + $0xf8] sm:$0xf]
        %v327 = vld [vmem:[#allocation5 + $0xfc] sm:$0xf]
        %v328 = vld [vmem:[#allocation5 + $0x100] sm:$0xf]
        %v329 = vld [vmem:[#allocation5 + $0x104] sm:$0xf]
        %v330 = vld [vmem:[#allocation5 + $0x108] sm:$0xf]
        %v331 = vld [vmem:[#allocation5 + $0x10c] sm:$0xf]
        %v332 = vld [vmem:[#allocation5 + $0x110] sm:$0xf]
        %v333 = vld [vmem:[#allocation5 + $0x114] sm:$0xf]
        %v334 = vld [vmem:[#allocation5 + $0x118] sm:$0xf]
        %v335 = vld [vmem:[#allocation5 + $0x11c] sm:$0xf]
        %v336 = vld [vmem:[#allocation5 + $0x120] sm:$0xf]
        %v337 = vld [vmem:[#allocation5 + $0x124] sm:$0xf]
        %v338 = vld [vmem:[#allocation5 + $0x128] sm:$0xf]
        %v339 = vld [vmem:[#allocation5 + $0x12c] sm:$0xf]
        %v340 = vld [vmem:[#allocation5 + $0x130] sm:$0xf]
        %v341 = vld [vmem:[#allocation5 + $0x134] sm:$0xf]
        %v342 = vld [vmem:[#allocation5 + $0x138] sm:$0xf]
        %v343 = vld [vmem:[#allocation5 + $0x13c] sm:$0xf]
        %v344 = vld [vmem:[#allocation5 + $0x140] sm:$0xf]
        %v345 = vld [vmem:[#allocation5 + $0x144] sm:$0xf]
        %v346 = vld [vmem:[#allocation5 + $0x148] sm:$0xf]
        %v347 = vld [vmem:[#allocation5 + $0x14c] sm:$0xf]
        %v348 = vld [vmem:[#allocation5 + $0x150] sm:$0xf]
        %v349 = vld [vmem:[#allocation5 + $0x154] sm:$0xf]
        %v350 = vld [vmem:[#allocation5 + $0x158] sm:$0xf]
        %v351 = vld [vmem:[#allocation5 + $0x15c] sm:$0xf]
        %v352 = vld [vmem:[#allocation5 + $0x160] sm:$0xf]
        %v353 = vld [vmem:[#allocation5 + $0x164] sm:$0xf]
        %v354 = vld [vmem:[#allocation5 + $0x168] sm:$0xf]
        %v355 = vld [vmem:[#allocation5 + $0x16c] sm:$0xf]
        %v356 = vld [vmem:[#allocation5 + $0x170] sm:$0xf]
        %v357 = vld [vmem:[#allocation5 + $0x174] sm:$0xf]
        %v358 = vld [vmem:[#allocation5 + $0x178] sm:$0xf]
        %v359 = vld [vmem:[#allocation5 + $0x17c] sm:$0xf]
        %v360 = vlaneseq
        %v361 = vshrl.u32 %v360, 7
        %v362 = vsub.s32 0, %v361
        %v363 = vrot.slane %v260, %v362
        %v367 = vunpack.c.l.b16 %v257
        %v368 = vunpack.c.h.b16 %v257
        %v369 = vunpack.c.l.b16 %v258
        %v370 = vunpack.c.h.b16 %v258
        %v371 = vunpack.c.l.b16 %v259
        %v372 = vunpack.c.h.b16 %v259
        %v373 = vpack.c.b16 %v367, %v367
        %v374 = vpack.c.b16 %v368, %v368
        %v375 = vpack.c.b16 %v369, %v369
        %v376 = vpack.c.b16 %v370, %v370
        %v377 = vpack.c.b16 %v371, %v371
        %v378 = vpack.c.b16 %v372, %v372
        %v481 = vunpack.c.l.b16 %v264
        %v482 = vunpack.c.l.b16 %v265
        %v483 = vunpack.c.l.b16 %v266
        %v484 = vunpack.c.l.b16 %v267
        %v485 = vunpack.c.l.b16 %v268
        %v486 = vunpack.c.l.b16 %v269
        %v487 = vunpack.c.l.b16 %v270
        %v488 = vunpack.c.l.b16 %v271
        %v489 = vunpack.c.l.b16 %v272
        %v490 = vunpack.c.l.b16 %v273
        %v491 = vunpack.c.l.b16 %v274
        %v492 = vunpack.c.l.b16 %v275
        %v493 = vunpack.c.l.b16 %v276
        %v494 = vunpack.c.l.b16 %v277
        %v495 = vunpack.c.l.b16 %v278
        %v496 = vunpack.c.l.b16 %v279
        %v497 = vunpack.c.l.b16 %v280
        %v498 = vunpack.c.l.b16 %v281
        %v499 = vunpack.c.l.b16 %v282
        %v500 = vunpack.c.l.b16 %v283
        %v501 = vunpack.c.l.b16 %v284
        %v502 = vunpack.c.l.b16 %v285
        %v503 = vunpack.c.l.b16 %v286
        %v504 = vunpack.c.l.b16 %v287
        %v505 = vunpack.c.l.b16 %v288
        %v506 = vunpack.c.l.b16 %v289
        %v507 = vunpack.c.l.b16 %v290
        %v508 = vunpack.c.l.b16 %v291
        %v509 = vunpack.c.l.b16 %v292
        %v510 = vunpack.c.l.b16 %v293
        %v511 = vunpack.c.l.b16 %v294
        %v512 = vunpack.c.l.b16 %v295
        %v513 = vunpack.c.l.b16 %v296
        %v514 = vunpack.c.l.b16 %v297
        %v515 = vunpack.c.l.b16 %v298
        %v516 = vunpack.c.l.b16 %v299
        %v517 = vunpack.c.l.b16 %v300
        %v518 = vunpack.c.l.b16 %v301
        %v519 = vunpack.c.l.b16 %v302
        %v520 = vunpack.c.l.b16 %v303
        %v521 = vunpack.c.l.b16 %v304
        %v522 = vunpack.c.l.b16 %v305
        %v523 = vunpack.c.l.b16 %v306
        %v524 = vunpack.c.l.b16 %v307
        %v525 = vunpack.c.l.b16 %v308
        %v526 = vunpack.c.l.b16 %v309
        %v527 = vunpack.c.l.b16 %v310
        %v528 = vunpack.c.l.b16 %v311
        %v529 = vunpack.c.l.b16 %v312
        %v530 = vunpack.c.l.b16 %v313
        %v531 = vunpack.c.l.b16 %v314
        %v532 = vunpack.c.l.b16 %v315
        %v533 = vunpack.c.l.b16 %v316
        %v534 = vunpack.c.l.b16 %v317
        %v535 = vunpack.c.l.b16 %v318
        %v536 = vunpack.c.l.b16 %v319
        %v537 = vunpack.c.l.b16 %v320
        %v538 = vunpack.c.l.b16 %v321
        %v539 = vunpack.c.l.b16 %v322
        %v540 = vunpack.c.l.b16 %v323
        %v541 = vunpack.c.l.b16 %v324
        %v542 = vunpack.c.l.b16 %v325
        %v543 = vunpack.c.l.b16 %v326
        %v544 = vunpack.c.l.b16 %v327
        %v545 = vunpack.c.l.b16 %v328
        %v546 = vunpack.c.l.b16 %v329
        %v547 = vunpack.c.l.b16 %v330
        %v548 = vunpack.c.l.b16 %v331
        %v549 = vunpack.c.l.b16 %v332
        %v550 = vunpack.c.l.b16 %v333
        %v551 = vunpack.c.l.b16 %v334
        %v552 = vunpack.c.l.b16 %v335
        %v553 = vunpack.c.l.b16 %v336
        %v554 = vunpack.c.l.b16 %v337
        %v555 = vunpack.c.l.b16 %v338
        %v556 = vunpack.c.l.b16 %v339
        %v557 = vunpack.c.l.b16 %v340
        %v558 = vunpack.c.l.b16 %v341
        %v559 = vunpack.c.l.b16 %v342
        %v560 = vunpack.c.l.b16 %v343
        %v561 = vunpack.c.l.b16 %v344
        %v562 = vunpack.c.l.b16 %v345
        %v563 = vunpack.c.l.b16 %v346
        %v564 = vunpack.c.l.b16 %v347
        %v565 = vunpack.c.l.b16 %v348
        %v566 = vunpack.c.l.b16 %v349
        %v567 = vunpack.c.l.b16 %v350
        %v568 = vunpack.c.l.b16 %v351
        %v569 = vunpack.c.l.b16 %v352
        %v570 = vunpack.c.l.b16 %v353
        %v571 = vunpack.c.l.b16 %v354
        %v572 = vunpack.c.l.b16 %v355
        %v573 = vunpack.c.l.b16 %v356
        %v574 = vunpack.c.l.b16 %v357
        %v575 = vunpack.c.l.b16 %v358
        %v576 = vunpack.c.l.b16 %v359
        %v577 = vpack.c.b16 %v482, %v481
        %v578 = vpack.c.b16 %v484, %v483
        %v579 = vpack.c.b16 %v486, %v485
        %v580 = vpack.c.b16 %v488, %v487
        %v581 = vpack.c.b16 %v490, %v489
        %v582 = vpack.c.b16 %v492, %v491
        %v583 = vpack.c.b16 %v494, %v493
        %v584 = vpack.c.b16 %v496, %v495
        %v585 = vpack.c.b16 %v498, %v497
        %v586 = vpack.c.b16 %v500, %v499
        %v587 = vpack.c.b16 %v502, %v501
        %v588 = vpack.c.b16 %v504, %v503
        %v589 = vpack.c.b16 %v506, %v505
        %v590 = vpack.c.b16 %v508, %v507
        %v591 = vpack.c.b16 %v510, %v509
        %v592 = vpack.c.b16 %v512, %v511
        %v593 = vpack.c.b16 %v514, %v513
        %v594 = vpack.c.b16 %v516, %v515
        %v595 = vpack.c.b16 %v518, %v517
        %v596 = vpack.c.b16 %v520, %v519
        %v597 = vpack.c.b16 %v522, %v521
        %v598 = vpack.c.b16 %v524, %v523
        %v599 = vpack.c.b16 %v526, %v525
        %v600 = vpack.c.b16 %v528, %v527
        %v601 = vpack.c.b16 %v530, %v529
        %v602 = vpack.c.b16 %v532, %v531
        %v603 = vpack.c.b16 %v534, %v533
        %v604 = vpack.c.b16 %v536, %v535
        %v605 = vpack.c.b16 %v538, %v537
        %v606 = vpack.c.b16 %v540, %v539
        %v607 = vpack.c.b16 %v542, %v541
        %v608 = vpack.c.b16 %v544, %v543
        %v609 = vpack.c.b16 %v546, %v545
        %v610 = vpack.c.b16 %v548, %v547
        %v611 = vpack.c.b16 %v550, %v549
        %v612 = vpack.c.b16 %v552, %v551
        %v613 = vpack.c.b16 %v554, %v553
        %v614 = vpack.c.b16 %v556, %v555
        %v615 = vpack.c.b16 %v558, %v557
        %v616 = vpack.c.b16 %v560, %v559
        %v617 = vpack.c.b16 %v562, %v561
        %v618 = vpack.c.b16 %v564, %v563
        %v619 = vpack.c.b16 %v566, %v565
        %v620 = vpack.c.b16 %v568, %v567
        %v621 = vpack.c.b16 %v570, %v569
        %v622 = vpack.c.b16 %v572, %v571
        %v623 = vpack.c.b16 %v574, %v573
        %v624 = vpack.c.b16 %v576, %v575
        %673 = vmatprep.subr.bf16.mxu0 0
        %674 = vmatpush1.bf16.msra.mxu0 %v577
        %675 = vmatprep.subr.bf16.mxu0 0
        %676 = vmatpush1.bf16.msra.mxu0 %v578
        %677 = vmatprep.subr.bf16.mxu0 0
        %678 = vmatpush1.bf16.msra.mxu0 %v579
        %679 = vmatprep.subr.bf16.mxu0 0
        %680 = vmatpush1.bf16.msra.mxu0 %v580
        %681 = vmatprep.subr.bf16.mxu0 0
        %682 = vmatpush1.bf16.msra.mxu0 %v581
        %683 = vmatprep.subr.bf16.mxu0 0
        %684 = vmatpush1.bf16.msra.mxu0 %v582
        %685 = vmatprep.subr.bf16.mxu0 0
        %686 = vmatpush1.bf16.msra.mxu0 %v583
        %687 = vmatprep.subr.bf16.mxu0 0
        %688 = vmatpush1.bf16.msra.mxu0 %v584
        %689 = vmatprep.subr.bf16.mxu0 0
        %690 = vmatpush1.bf16.msra.mxu0 %v585
        %691 = vmatprep.subr.bf16.mxu0 0
        %692 = vmatpush1.bf16.msra.mxu0 %v586
        %693 = vmatprep.subr.bf16.mxu0 0
        %694 = vmatpush1.bf16.msra.mxu0 %v587
        %695 = vmatprep.subr.bf16.mxu0 0
        %696 = vmatpush1.bf16.msra.mxu0 %v588
        %697 = vmatprep.subr.bf16.mxu0 0
        %698 = vmatpush1.bf16.msra.mxu0 %v589
        %699 = vmatprep.subr.bf16.mxu0 0
        %700 = vmatpush1.bf16.msra.mxu0 %v590
        %701 = vmatprep.subr.bf16.mxu0 0
        %702 = vmatpush1.bf16.msra.mxu0 %v591
        %703 = vmatprep.subr.bf16.mxu0 0
        %704 = vmatpush1.bf16.msra.mxu0 %v592
        %705 = vmatprep.mubr.bf16.mxu0 %v374
        %706 = vmatmul.mubr.bf16.gmra.mrb[0].mxu0 %v373
        %v707 = vpop.f32.mrb[0].mxu0
        %v708 = vadd.f32 %v363, %v707
        %v709 = vpop.f32.mrb[0].mxu0
        %v710 = vpop.f32.mrb[0].mxu0
        %v711 = vpop.f32.mrb[0].mxu0
        %712 = vdwg.mxu0
        %713 = vmatprep.subr.bf16.mxu0 0
        %714 = vmatpush1.bf16.msra.mxu0 %v593
        %715 = vmatprep.subr.bf16.mxu0 0
        %716 = vmatpush1.bf16.msra.mxu0 %v594
        %717 = vmatprep.subr.bf16.mxu0 0
        %718 = vmatpush1.bf16.msra.mxu0 %v595
        %719 = vmatprep.subr.bf16.mxu0 0
        %720 = vmatpush1.bf16.msra.mxu0 %v596
        %721 = vmatprep.subr.bf16.mxu0 0
        %722 = vmatpush1.bf16.msra.mxu0 %v597
        %723 = vmatprep.subr.bf16.mxu0 0
        %724 = vmatpush1.bf16.msra.mxu0 %v598
        %725 = vmatprep.subr.bf16.mxu0 0
        %726 = vmatpush1.bf16.msra.mxu0 %v599
        %727 = vmatprep.subr.bf16.mxu0 0
        %728 = vmatpush1.bf16.msra.mxu0 %v600
        %729 = vmatprep.subr.bf16.mxu0 0
        %730 = vmatpush1.bf16.msra.mxu0 %v601
        %731 = vmatprep.subr.bf16.mxu0 0
        %732 = vmatpush1.bf16.msra.mxu0 %v602
        %733 = vmatprep.subr.bf16.mxu0 0
        %734 = vmatpush1.bf16.msra.mxu0 %v603
        %735 = vmatprep.subr.bf16.mxu0 0
        %736 = vmatpush1.bf16.msra.mxu0 %v604
        %737 = vmatprep.subr.bf16.mxu0 0
        %738 = vmatpush1.bf16.msra.mxu0 %v605
        %739 = vmatprep.subr.bf16.mxu0 0
        %740 = vmatpush1.bf16.msra.mxu0 %v606
        %741 = vmatprep.subr.bf16.mxu0 0
        %742 = vmatpush1.bf16.msra.mxu0 %v607
        %743 = vmatprep.subr.bf16.mxu0 0
        %744 = vmatpush1.bf16.msra.mxu0 %v608
        %745 = vmatprep.mubr.bf16.mxu0 %v376
        %746 = vmatmul.mubr.bf16.gmra.mrb[0].mxu0 %v375
        %v747 = vpop.f32.mrb[0].mxu0
        %v748 = vadd.f32 %v708, %v747
        %v749 = vpop.f32.mrb[0].mxu0
        %v750 = vpop.f32.mrb[0].mxu0
        %v751 = vpop.f32.mrb[0].mxu0
        %752 = vdwg.mxu0
        %753 = vmatprep.subr.bf16.mxu0 0
        %754 = vmatpush1.bf16.msra.mxu0 %v609
        %755 = vmatprep.subr.bf16.mxu0 0
        %756 = vmatpush1.bf16.msra.mxu0 %v610
        %757 = vmatprep.subr.bf16.mxu0 0
        %758 = vmatpush1.bf16.msra.mxu0 %v611
        %759 = vmatprep.subr.bf16.mxu0 0
        %760 = vmatpush1.bf16.msra.mxu0 %v612
        %761 = vmatprep.subr.bf16.mxu0 0
        %762 = vmatpush1.bf16.msra.mxu0 %v613
        %763 = vmatprep.subr.bf16.mxu0 0
        %764 = vmatpush1.bf16.msra.mxu0 %v614
        %765 = vmatprep.subr.bf16.mxu0 0
        %766 = vmatpush1.bf16.msra.mxu0 %v615
        %767 = vmatprep.subr.bf16.mxu0 0
        %768 = vmatpush1.bf16.msra.mxu0 %v616
        %769 = vmatprep.subr.bf16.mxu0 0
        %770 = vmatpush1.bf16.msra.mxu0 %v617
        %771 = vmatprep.subr.bf16.mxu0 0
        %772 = vmatpush1.bf16.msra.mxu0 %v618
        %773 = vmatprep.subr.bf16.mxu0 0
        %774 = vmatpush1.bf16.msra.mxu0 %v619
        %775 = vmatprep.subr.bf16.mxu0 0
        %776 = vmatpush1.bf16.msra.mxu0 %v620
        %777 = vmatprep.subr.bf16.mxu0 0
        %778 = vmatpush1.bf16.msra.mxu0 %v621
        %779 = vmatprep.subr.bf16.mxu0 0
        %780 = vmatpush1.bf16.msra.mxu0 %v622
        %781 = vmatprep.subr.bf16.mxu0 0
        %782 = vmatpush1.bf16.msra.mxu0 %v623
        %783 = vmatprep.subr.bf16.mxu0 0
        %784 = vmatpush1.bf16.msra.mxu0 %v624
        %785 = vmatprep.mubr.bf16.mxu0 %v378
        %786 = vmatmul.mubr.bf16.gmra.mrb[0].mxu0 %v377
        %v787 = vpop.f32.mrb[0].mxu0
        %v788 = vadd.f32 %v748, %v787
        %v789 = vpop.f32.mrb[0].mxu0
        %v790 = vpop.f32.mrb[0].mxu0
        %v791 = vpop.f32.mrb[0].mxu0
        %792 = vdwg.mxu0
        %v793 = vlaneseq
        %v794 = vand.u32 %v793, 127
        %vm795 = vcmp.lt.s32.totalorder %v794, 48
        %vm796 = vcmp.ge.s32.totalorder %v794, 48
        %vm797 = vcmp.lt.s32.totalorder %v794, 58
        %vm798 = vmand %vm796, %vm797
        %v799 = vsel %vm795, %v788, 0.0
        %800 = vadd.xlane.f32.xlu0 %v799
        %v801 = vpop.xlane.xlu0 %800
        %v802 = vmul.f32 %v801, 0.020833334
        %v803 = vsub.f32 %v788, %v802
        %v804 = vsel %vm795, %v803, 0.0
        %v805 = vmul.f32 %v804, %v804
        %806 = vadd.xlane.f32.xlu0 %v805
        %v807 = vpop.xlane.xlu0 %806
        %v808 = vmul.f32 %v807, 0.020833334
        %v809 = vadd.f32 %v808, 1e-05
        %v810 = vrsqrt.pop %v809
        %v811 = vmul.f32 %v804, %v810
        %v812 = vlaneseq
        %v813 = vshrl.u32 %v812, 7
        %v814 = vsub.s32 0, %v813
        %v815 = vrot.slane %v261, %v814
        %v816 = vmul.f32 %v811, %v815
        %v817 = vlaneseq
        %v818 = vshrl.u32 %v817, 7
        %v819 = vsub.s32 0, %v818
        %v820 = vrot.slane %v262, %v819
        %v821 = vadd.f32 %v816, %v820
        %v822 = vpack.c.bf16 %v821, %v821
        %v823 = vld [vmem:[#allocation8] sm:$0xf]
        %v824 = vld [vmem:[#allocation8 + $0x4] sm:$0xf]
        %v825 = vld [vmem:[#allocation8 + $0x8] sm:$0xf]
        %v826 = vld [vmem:[#allocation8 + $0xc] sm:$0xf]
        %v827 = vld [vmem:[#allocation8 + $0x10] sm:$0xf]
        %v828 = vld [vmem:[#allocation8 + $0x14] sm:$0xf]
        %v829 = vld [vmem:[#allocation8 + $0x18] sm:$0xf]
        %v830 = vld [vmem:[#allocation8 + $0x1c] sm:$0xf]
        %v831 = vld [vmem:[#allocation8 + $0x20] sm:$0xf]
        %v832 = vld [vmem:[#allocation8 + $0x24] sm:$0xf]
        %v833 = vld [vmem:[#allocation8 + $0x28] sm:$0xf]
        %v834 = vld [vmem:[#allocation8 + $0x2c] sm:$0xf]
        %v835 = vld [vmem:[#allocation8 + $0x30] sm:$0xf]
        %v836 = vld [vmem:[#allocation8 + $0x34] sm:$0xf]
        %v837 = vld [vmem:[#allocation8 + $0x38] sm:$0xf]
        %v838 = vld [vmem:[#allocation8 + $0x3c] sm:$0xf]
        %v839 = vlaneseq
        %v840 = vshrl.u32 %v839, 7
        %v841 = vsub.s32 0, %v840
        %v842 = vrot.slane %v263, %v841
        %v859 = vunpack.c.l.b16 %v823
        %v860 = vunpack.c.l.b16 %v824
        %v861 = vunpack.c.l.b16 %v825
        %v862 = vunpack.c.l.b16 %v826
        %v863 = vunpack.c.l.b16 %v827
        %v864 = vunpack.c.l.b16 %v828
        %v865 = vunpack.c.l.b16 %v829
        %v866 = vunpack.c.l.b16 %v830
        %v867 = vunpack.c.l.b16 %v831
        %v868 = vunpack.c.l.b16 %v832
        %v869 = vunpack.c.l.b16 %v833
        %v870 = vunpack.c.l.b16 %v834
        %v871 = vunpack.c.l.b16 %v835
        %v872 = vunpack.c.l.b16 %v836
        %v873 = vunpack.c.l.b16 %v837
        %v874 = vunpack.c.l.b16 %v838
        %v875 = vpack.c.b16 %v860, %v859
        %v876 = vpack.c.b16 %v862, %v861
        %v877 = vpack.c.b16 %v864, %v863
        %v878 = vpack.c.b16 %v866, %v865
        %v879 = vpack.c.b16 %v868, %v867
        %v880 = vpack.c.b16 %v870, %v869
        %v881 = vpack.c.b16 %v872, %v871
        %v882 = vpack.c.b16 %v874, %v873
        %891 = vmatprep.subr.bf16.mxu0 0
        %892 = vmatpush1.bf16.msra.mxu0 %v875
        %893 = vmatprep.subr.bf16.mxu0 0
        %894 = vmatpush1.bf16.msra.mxu0 %v876
        %895 = vmatprep.subr.bf16.mxu0 0
        %896 = vmatpush1.bf16.msra.mxu0 %v877
        %897 = vmatprep.subr.bf16.mxu0 0
        %898 = vmatpush1.bf16.msra.mxu0 %v878
        %899 = vmatprep.subr.bf16.mxu0 0
        %900 = vmatpush1.bf16.msra.mxu0 %v879
        %901 = vmatprep.subr.bf16.mxu0 0
        %902 = vmatpush1.bf16.msra.mxu0 %v880
        %903 = vmatprep.subr.bf16.mxu0 0
        %904 = vmatpush1.bf16.msra.mxu0 %v881
        %905 = vmatprep.subr.bf16.mxu0 0
        %906 = vmatpush1.bf16.msra.mxu0 %v882
        %907 = vmatprep.subr.bf16.mxu0 0
        %908 = vmatpush1.bf16.msra.mxu0 0
        %909 = vmatprep.subr.bf16.mxu0 0
        %910 = vmatpush1.bf16.msra.mxu0 0
        %911 = vmatprep.subr.bf16.mxu0 0
        %912 = vmatpush1.bf16.msra.mxu0 0
        %913 = vmatprep.subr.bf16.mxu0 0
        %914 = vmatpush1.bf16.msra.mxu0 0
        %915 = vmatprep.subr.bf16.mxu0 0
        %916 = vmatpush1.bf16.msra.mxu0 0
        %917 = vmatprep.subr.bf16.mxu0 0
        %918 = vmatpush1.bf16.msra.mxu0 0
        %919 = vmatprep.subr.bf16.mxu0 0
        %920 = vmatpush1.bf16.msra.mxu0 0
        %921 = vmatprep.subr.bf16.mxu0 0
        %922 = vmatpush1.bf16.msra.mxu0 0
        %923 = vmatprep.mubr.bf16.mxu0 0
        %924 = vmatmul.mubr.bf16.gmra.mrb[0].mxu0 %v822
        %v925 = vpop.f32.mrb[0].mxu0
        %v926 = vadd.f32 %v842, %v925
        %v927 = vpop.f32.mrb[0].mxu0
        %v928 = vpop.f32.mrb[0].mxu0
        %v929 = vpop.f32.mrb[0].mxu0
        %930 = vdwg.mxu0
        %v931 = vsel %vm798, %v788, 0.0
        %v932 = vadd.f32 %v926, %v931
        %933 = vst [vmem:[%s255] sm:$0xff] %v932
        %s934 = sand.u32 %s120, 1
        %s935 = scalar_lea.sflag [#allocation4], %s934
        %s936 = sand.u32 %s120, 1
        %s937 = smul.addr %s936, 8
        %s938 = scalar_lea.vmem [#allocation10], %s937
        // Predicated region
        $region53: #{tpu_custom_call.1} parent=35 // pred_check
          %p939 = pneg %p130
        $region54: #{tpu_custom_call.1} parent=35 // pred_check_branch
          %941 = sbr.rel (%p939) target = $region56
        $region55: #{tpu_custom_call.1} parent=35 // pred_region
          %s943 = ssub.s32 128, 128
          %944 = vsyncadd %s935, %s943
          %s945 = smul.addr %s23, 128
          %s946 = scalar_lea.hbm %s4, %s945
          %s948 = sshll.u32 %s938, 4
          %s949 = int_to_ptr.vmem [resolvable:$true] %s948
          %951 = dma.vmem_to_hbm [thread:$0]  %s949, 128, %s946, %s935
        $region56: #{tpu_custom_call.1} parent=35 // pred_fallthru
          _
      $region36: #{tpu_custom_call.1} parent=5 // pred_fallthru
        _
      %p952 = scmp.le.s32.totalorder 2, %s18
      // Predicated region
      $region57: #{tpu_custom_call.1} parent=5 // pred_check
        %p953 = pneg %p952
      $region58: #{tpu_custom_call.1} parent=5 // pred_check_branch
        %955 = sbr.rel (%p953) target = $region60
      $region59: #{tpu_custom_call.1} parent=5 // pred_region
        %s956 = ssub.s32 %s18, 2
        // Predicated region
        $region61: #{tpu_custom_call.1} parent=59 // pred_check
          %p957 = pneg %p136
        $region62: #{tpu_custom_call.1} parent=59 // pred_check_branch
          %959 = sbr.rel (%p957) target = $region64
        $region63: #{tpu_custom_call.1} parent=59 // pred_region
          %s960 = sand.u32 %s121, 1
          %s961 = scalar_lea.sflag [#allocation4], %s960
          %s962 = sand.u32 %s121, 1
          %s963 = smul.addr %s962, 8
          %s964 = scalar_lea.vmem [#allocation10], %s963
          %965 = dma.done %s961, 128
        $region64: #{tpu_custom_call.1} parent=59 // pred_fallthru
          _
      $region60: #{tpu_custom_call.1} parent=5 // pred_fallthru
        _
    $region6: #{tpu_custom_call.1} parent=1 // loop_footer
      %s22 = sadd.s32 1, %s18
    $region7: #{tpu_custom_call.1} parent=1 // loop_footer_branch
      %17 = sbr.rel target = $region3
    $region8: #{tpu_custom_call.1} parent=1 // loop_exit
      _
    %966 = vsyncpa [#allocation3], 1
    %s967 = scalar_lea.sflag [#allocation3], 1
    %968 = vsyncpa %s967, 1
    %969 = vsyncpa [#allocation6], 1
    %970 = vsyncpa [#allocation9], 1
    %971 = vsyncpa [#allocation4], 1
    %s972 = scalar_lea.sflag [#allocation4], 1
    %973 = vsyncpa %s972, 1

</llo_original>
